<compile_context>
chip_gen: v5e
topology: v5e:2x2
jax: 0.10.0
libtpu: 0.0.40
codegen_flags: <defaults>
</compile_context>

<pallas_src>
import jax
import jax.numpy as jnp
from jax.experimental import pallas as pl
from jax.experimental.pallas import tpu as pltpu


def _classify_kernel(x_ref, w12t_ref, b12t_ref, w3_ref, b3_ref, o_ref):
    # x_ref:    (TB, D_in) f32   -- streamed batch tile (straight from HBM)
    # w12t_ref: (d2, D_in) bf16  -- fused (l2 o l1) weight = W2 @ W1, resident
    # b12t_ref: (d2, 1)    f32   -- fused bias column, resident
    # w3_ref:   (1, d2)    bf16  -- l3 weight, resident
    # b3_ref:   (1, 1)     f32   -- scalar l3 bias in SMEM
    # o_ref:    (1, TB)    f32   -- lane-dense output strip for this tile

    # In-kernel cast (cheap VPU pack) -- x stays f32 in HBM.
    xb = x_ref[...].astype(jnp.bfloat16)                       # (TB, D_in)

    # Fused layer 1+2 with batch in the lane dim: h^T = W12^T @ x^T -> (d2, TB).
    # Contraction over the lane dim of both operands (same pattern as q @ k^T
    # in flash attention); bf16 x bf16 -> f32 accumulation on the MXU.
    ht = jax.lax.dot_general(
        w12t_ref[...], xb,
        dimension_numbers=(((1,), (1,)), ((), ())),
        preferred_element_type=jnp.float32)                    # (d2, TB)
    ht = ht + b12t_ref[...]                                    # (d2, 1) bcast
    # leaky_relu, PyTorch default negative_slope = 0.01
    ht = jnp.where(ht > 0, ht, 0.01 * ht)

    # Layer 3: (1, d2) @ (d2, TB) -> (1, TB); no transpose, lane-dense result.
    logits = jnp.dot(w3_ref[...], ht.astype(jnp.bfloat16),
                     preferred_element_type=jnp.float32)       # (1, TB)
    logits = logits + b3_ref[0, 0]

    # sigmoid: exp and approximate reciprocal both run on the EUP slot.
    o_ref[...] = pl.reciprocal(1.0 + jnp.exp(-logits), approx=True)


def _round_up(n, m):
    return ((n + m - 1) // m) * m


def _default_tb_max():
    """Batch-tile cap scaled with HBM bandwidth (always a multiple of 128)."""
    try:
        kind = jax.devices()[0].device_kind.lower()
    except Exception:
        return 8192
    if "v5" in kind:
        return 4096
    if "v6" in kind:
        return 8192
    if "v7" in kind or "7x" in kind:
        return 16384
    return 8192


def classify_forward(x, params, *, tb_max=None):
    """Forward pass. x: (B, D_in) float32. params: dict from init_params."""
    B, D_in = x.shape
    if x.dtype != jnp.float32:
        x = x.astype(jnp.float32)
    w12t, b12t, w3, b3 = params["w12t"], params["b12t"], params["w3"], params["b3"]
    d2 = w12t.shape[0]

    if tb_max is None:
        tb_max = _default_tb_max()
    tb_max = max(128, (tb_max // 128) * 128)
    # Tile is a multiple of 128 ((8,128)-aligned x tiles, unmasked lane-dense
    # stores) and chosen so the grid has >= 2 tiles whenever B allows it.
    tb = max(128, min(tb_max, _round_up(pl.cdiv(B, 2), 128)))
    num_tiles = pl.cdiv(B, tb)   # ragged tail handled by partial-block masking

    strip = pl.pallas_call(
        _classify_kernel,
        out_shape=jax.ShapeDtypeStruct((1, B), jnp.float32),
        grid=(num_tiles,),
        in_specs=[
            pl.BlockSpec((tb, D_in), lambda i: (i, 0)),           # streamed f32 x
            pl.BlockSpec((d2, D_in), lambda i: (0, 0)),           # resident W12^T
            pl.BlockSpec((d2, 1),    lambda i: (0, 0)),           # resident b12^T
            pl.BlockSpec((1, d2),    lambda i: (0, 0)),           # resident w3
            pl.BlockSpec(memory_space=pltpu.MemorySpace.SMEM),    # scalar b3
        ],
        out_specs=pl.BlockSpec((1, tb), lambda i: (0, i)),        # lane-dense strip
        compiler_params=pltpu.CompilerParams(
            dimension_semantics=("parallel",)),
    )(x, w12t, b12t, w3, b3)

    return strip.reshape(B, 1)


def init_params(key, D_in, d1, d2):
    """Matches the PyTorch module's init (weights ~ U(-0.8, 0.8); biases keep
    the nn.Linear default U(-1/sqrt(fan_in), +1/sqrt(fan_in))), then fuses the
    two back-to-back linear layers offline (exact in f32, no activation
    between them in the module's forward):
        l2(l1(x)) = x @ (W1^T W2^T) + (b1 W2^T + b2)
    stored transposed for the batch-in-lane kernel layout."""
    ks = jax.random.split(key, 6)
    hp = jax.lax.Precision.HIGHEST
    w1 = jax.random.uniform(ks[0], (d1, D_in), jnp.float32, -0.8, 0.8)
    w2 = jax.random.uniform(ks[1], (d2, d1), jnp.float32, -0.8, 0.8)
    w3 = jax.random.uniform(ks[2], (1, d2), jnp.float32, -0.8, 0.8)
    b1 = jax.random.uniform(ks[3], (1, d1), jnp.float32,
                            -1.0 / jnp.sqrt(D_in), 1.0 / jnp.sqrt(D_in))
    b2 = jax.random.uniform(ks[4], (1, d2), jnp.float32,
                            -1.0 / jnp.sqrt(d1), 1.0 / jnp.sqrt(d1))
    b3 = jax.random.uniform(ks[5], (1, 1), jnp.float32,
                            -1.0 / jnp.sqrt(d2), 1.0 / jnp.sqrt(d2))
    w12t = jnp.dot(w2, w1, precision=hp)                 # (d2, D_in)
    b12t = (jnp.dot(b1, w2.T, precision=hp) + b2).T      # (d2, 1)
    return {
        "w12t": w12t.astype(jnp.bfloat16),
        "b12t": b12t.astype(jnp.float32),
        "w3": w3.astype(jnp.bfloat16),
        "b3": b3.astype(jnp.float32),
    }


def _reference(x, params):
    """Pure-JAX f32 reference using the same bf16-rounded operands as the kernel."""
    hp = jax.lax.Precision.HIGHEST
    xb = x.astype(jnp.bfloat16).astype(jnp.float32)
    w12t = params["w12t"].astype(jnp.float32)
    h = jnp.dot(xb, w12t.T, precision=hp) + params["b12t"].T      # (B, d2)
    h = jnp.where(h > 0, h, 0.01 * h)
    hb = h.astype(jnp.bfloat16).astype(jnp.float32)
    w3 = params["w3"].astype(jnp.float32)
    logits = jnp.dot(hb, w3.T, precision=hp) + params["b3"][0, 0]
    return jax.nn.sigmoid(logits)                                  # (B, 1)


if __name__ == "__main__":
    key = jax.random.PRNGKey(0)
    D_in, d1, d2 = 32, 64, 32
    kx, kp = jax.random.split(key)
    params = init_params(kp, D_in, d1, d2)

    # One 128-aligned batch and one ragged batch (exercises partial-block
    # masking on the tail tile and the >= 2-tile parallel grid).
    for B in (1024, 500):
        x = jax.random.normal(jax.random.fold_in(kx, B), (B, D_in), jnp.float32)
        out = jax.block_until_ready(classify_forward(x, params))
        ref = _reference(x, params)
        assert out.shape == (B, 1), out.shape
        err = float(jnp.max(jnp.abs(out - ref)))
        # bf16 matmul operands + approx reciprocal -> small, bounded divergence.
        assert jnp.allclose(out, ref, atol=5e-3, rtol=5e-3), err

    print("KERNEL_OK")
</pallas_src>

<mosaic_0001>
module attributes {stable_mosaic.version = 11 : i64} {
  func.func @_classify_kernel(%arg0: i32, %arg1: memref<512x32xf32, #tpu.memory_space<vmem>>, %arg2: memref<32x32xbf16, #tpu.memory_space<vmem>>, %arg3: memref<32x1xf32, #tpu.memory_space<vmem>>, %arg4: memref<1x32xbf16, #tpu.memory_space<vmem>>, %arg5: memref<1x1xf32, #tpu.memory_space<smem>>, %arg6: memref<1x512xf32, #tpu.memory_space<vmem>>) attributes {dimension_semantics = [#tpu.dimension_semantics<parallel>], iteration_bounds = array<i64: 2>, scalar_prefetch = 0 : i64, scratch_operands = 0 : i64, tpu.core_type = #tpu.core_type<tc>, window_params = [{transform_indices = @transform_0, window_bounds = array<i64: 512, 32>}, {pipeline_mode = #tpu.pipeline_mode<synchronous>, transform_indices = @transform_1, window_bounds = array<i64: 32, 32>}, {pipeline_mode = #tpu.pipeline_mode<synchronous>, transform_indices = @transform_2, window_bounds = array<i64: 32, 1>}, {pipeline_mode = #tpu.pipeline_mode<synchronous>, transform_indices = @transform_3, window_bounds = array<i64: 1, 32>}, {transform_indices = @transform_4, window_bounds = array<i64: 1, 1>}, {transform_indices = @transform_5, window_bounds = array<i64: 1, 512>}]} {
    %c0 = arith.constant 0 : index
    %c0_0 = arith.constant 0 : index
    %0 = vector.load %arg1[%c0, %c0_0] : memref<512x32xf32, #tpu.memory_space<vmem>>, vector<512x32xf32>
    %1 = arith.truncf %0 : vector<512x32xf32> to vector<512x32xbf16>
    %c0_1 = arith.constant 0 : index
    %c0_2 = arith.constant 0 : index
    %2 = vector.load %arg2[%c0_1, %c0_2] : memref<32x32xbf16, #tpu.memory_space<vmem>>, vector<32x32xbf16>
    %cst = arith.constant dense<0.000000e+00> : vector<32x512xf32>
    %3 = tpu.matmul %2, %1, %cst {dimension_numbers = #tpu.dot_dimension_numbers<[1], [1], [0], [0], [0, 0, 1, 0], [], []>} : vector<32x32xbf16>, vector<512x32xbf16>, vector<32x512xf32> -> vector<32x512xf32>
    %c0_3 = arith.constant 0 : index
    %c0_4 = arith.constant 0 : index
    %4 = vector.load %arg3[%c0_3, %c0_4] : memref<32x1xf32, #tpu.memory_space<vmem>>, vector<32x1xf32>
    %5 = vector.broadcast %4 : vector<32x1xf32> to vector<32x512xf32>
    %6 = arith.addf %3, %5 : vector<32x512xf32>
    %cst_5 = arith.constant 0.000000e+00 : f32
    %7 = vector.broadcast %cst_5 : f32 to vector<32x512xf32>
    %8 = arith.cmpf ogt, %6, %7 : vector<32x512xf32>
    %cst_6 = arith.constant 0.00999999977 : f32
    %9 = vector.broadcast %cst_6 : f32 to vector<32x512xf32>
    %10 = arith.mulf %9, %6 : vector<32x512xf32>
    %11 = arith.select %8, %6, %10 : vector<32x512xi1>, vector<32x512xf32>
    %c0_7 = arith.constant 0 : index
    %c0_8 = arith.constant 0 : index
    %12 = vector.load %arg4[%c0_7, %c0_8] : memref<1x32xbf16, #tpu.memory_space<vmem>>, vector<1x32xbf16>
    %13 = arith.truncf %11 : vector<32x512xf32> to vector<32x512xbf16>
    %cst_9 = arith.constant dense<0.000000e+00> : vector<1x512xf32>
    %14 = tpu.matmul %12, %13, %cst_9 {dimension_numbers = #tpu.dot_dimension_numbers<[1], [0], [0], [1], [0, 0, 1, 1], [], []>} : vector<1x32xbf16>, vector<32x512xbf16>, vector<1x512xf32> -> vector<1x512xf32>
    %c0_10 = arith.constant 0 : index
    %c0_11 = arith.constant 0 : index
    %15 = memref.load %arg5[%c0_10, %c0_11] : memref<1x1xf32, #tpu.memory_space<smem>>
    %16 = vector.broadcast %15 : f32 to vector<1x512xf32>
    %17 = arith.addf %14, %16 : vector<1x512xf32>
    %cst_12 = arith.constant 0.000000e+00 : f32
    %18 = vector.broadcast %cst_12 : f32 to vector<1x512xf32>
    %19 = arith.subf %18, %17 : vector<1x512xf32>
    %20 = math.exp %19 : vector<1x512xf32>
    %cst_13 = arith.constant 1.000000e+00 : f32
    %21 = vector.broadcast %cst_13 : f32 to vector<1x512xf32>
    %22 = arith.addf %21, %20 : vector<1x512xf32>
    %23 = tpu.reciprocal %22 {approx = true} : vector<1x512xf32> -> vector<1x512xf32>
    %c0_14 = arith.constant 0 : index
    %c0_15 = arith.constant 0 : index
    %24 = vector.load %arg6[%c0_14, %c0_15] : memref<1x512xf32, #tpu.memory_space<vmem>>, vector<1x512xf32>
    tpu.vector_store %arg6[%c0_14, %c0_15], %23 {strides = array<i32>} : memref<1x512xf32, #tpu.memory_space<vmem>>, vector<1x512xf32>,
    return
  }
  func.func @transform_0(%arg0: i32) -> (i32, i32) {
    %c0_i32 = arith.constant 0 : i32
    %c0_i32_0 = arith.constant 0 : i32
    return %arg0, %c0_i32 : i32, i32
  }
  func.func @transform_1(%arg0: i32) -> (i32, i32) {
    %c0_i32 = arith.constant 0 : i32
    %c0_i32_0 = arith.constant 0 : i32
    %c0_i32_1 = arith.constant 0 : i32
    return %c0_i32, %c0_i32_0 : i32, i32
  }
  func.func @transform_2(%arg0: i32) -> (i32, i32) {
    %c0_i32 = arith.constant 0 : i32
    %c0_i32_0 = arith.constant 0 : i32
    %c0_i32_1 = arith.constant 0 : i32
    return %c0_i32, %c0_i32_0 : i32, i32
  }
  func.func @transform_3(%arg0: i32) -> (i32, i32) {
    %c0_i32 = arith.constant 0 : i32
    %c0_i32_0 = arith.constant 0 : i32
    %c0_i32_1 = arith.constant 0 : i32
    return %c0_i32, %c0_i32_0 : i32, i32
  }
  func.func @transform_4(%arg0: i32) -> (i32, i32) {
    %c0_i32 = arith.constant 0 : i32
    %c0_i32_0 = arith.constant 0 : i32
    %c0_i32_1 = arith.constant 0 : i32
    return %c0_i32, %c0_i32_0 : i32, i32
  }
  func.func @transform_5(%arg0: i32) -> (i32, i32) {
    %c0_i32 = arith.constant 0 : i32
    %c0_i32_0 = arith.constant 0 : i32
    return %c0_i32, %arg0 : i32, i32
  }
}

</mosaic_0001>

<llo_original>
// kernel: tpu_custom_call.1
$region0: #{tpu_custom_call.1}
  #allocation0 [shape = 'u32[]', space=smem, size = 0x4, offset = 0x4, fixed_abs, tag = 'smem constant byte address 0x4 - core index']
  #allocation1 [shape = 'u32[72,128]{1,0:T(1,128)}', space=vmem, size = 0x9000, scoped, tag = 'internal scratch']
  #allocation2 [shape = 'f32[1,1]{1,0:T(1,128)S(6)}', space=smem, size = 0x200, scoped, tag = 'scoped memory for tpu_custom_call.1']
  %s0 = inlined_call_operand.vmem [shape: f32[1024,32], index: 0, kind: input, shape index: {}]
  %s1 = inlined_call_operand.vmem [shape: bf16[32,32], index: 1, kind: input, shape index: {}]
  %s2 = inlined_call_operand.vmem [shape: f32[32,1], index: 2, kind: input, shape index: {}]
  %s3 = inlined_call_operand.vmem [shape: bf16[1,32], index: 3, kind: input, shape index: {}]
  %s4 = inlined_call_operand.<no memory space> [shape: f32[1,1], index: 4, kind: input, shape index: {}]
  %s5 = inlined_call_operand.hbm [shape: f32[1,1024], index: 5, kind: output, shape index: {}]
  %s6 = sld [smem:[#allocation0]]
  $region53: #{tpu_custom_call.1} parent=0
    _
  %s8 = ssub.s32 1, %s6
  %s9 = scalar_select 0, %s8, %s6
  %10 = sst [smem:[#allocation2]] %s4
  $region1: #{tpu_custom_call.1} parent=0
    #allocation3 [shape = 'u8[4096]{0}', space=vmem, size = 0x1000, scoped, tag = 'output window, operand 0']
    #allocation4 [shape = 's32[2]{0}', space=sflag, size = 0x8, scoped, tag = 'scoped memory for tpu_custom_call.1']
    %11 = vsyncpa [#allocation4], 0
    %s12 = scalar_lea.sflag [#allocation4], 1
    %13 = vsyncpa %s12, 0
    loop: start=0, step=1, limit=4
    $region2: #{tpu_custom_call.1} parent=1 // loop_pre_header
      _
    $region3: #{tpu_custom_call.1} parent=1 // loop_header
      %s15 = sphi 0, %s19
      %p16 = scmp.ge.s32.totalorder %s15, 4
      %s25 = sphi 0, %s27
      %s28 = sphi 0, %s25
      %s29 = sphi 0, %s28
      %s45 = sphi 0, %s29
      %s49 = sphi 0, %s49
      %s51 = sphi 0, %s49
      %s52 = sphi 0, %s51
      %s66 = sphi 0, %s52
      %s70 = sphi 0, %s70
      %s72 = sphi 0, %s70
      %s73 = sphi 0, %s72
      %s87 = sphi 0, %s73
      %s91 = sphi 0, %s91
      %s93 = sphi 0, %s91
      %s94 = sphi 0, %s93
      %s108 = sphi 0, %s94
      %s112 = sphi 0, %s112
      %s114 = sphi 0, %s112
      %s115 = sphi 0, %s114
      %s129 = sphi 0, %s115
      %s135 = sphi 0, %s137
      %s138 = sphi 0, %s135
      %s139 = sphi 0, %s138
      %s155 = sphi 0, %s139
    $region4: #{tpu_custom_call.1} parent=1 // loop_header_branch
      %18 = sbr.rel (%p16) target = $region8
    $region5: #{tpu_custom_call.1} parent=1 // loop_body
      %s20 = ssub.s32 %s15, 1
      %s21 = ssub.s32 %s15, 2
      %s22 = sadd.s32 %s15, 1
      %s23 = ssub.s32 %s15, %s22
      %p24 = scmp.eq.s32.totalorder %s23, 0
      %s26 = sadd.s32 %s25, 1
      %s27 = scalar_select %p24, %s25, %s26
      %p30 = pneg %p24
      %p31 = scmp.eq.s32.totalorder %s15, 1
      %p32 = por %p30, %p31
      %p33 = scmp.ne.s32.totalorder %s25, %s28
      %p34 = scmp.eq.s32.totalorder %s15, 0
      %p35 = por %p33, %p34
      %p36 = scmp.ne.s32.totalorder %s25, %s28
      %p37 = scmp.eq.s32.totalorder %s20, 1
      %p38 = por %p36, %p37
      %p39 = scmp.ne.s32.totalorder %s28, %s29
      %p40 = scmp.eq.s32.totalorder %s20, 0
      %p41 = por %p39, %p40
      %p42 = scmp.ne.s32.totalorder %s28, %s29
      %p43 = scmp.eq.s32.totalorder %s21, 1
      %p44 = por %p42, %p43
      %p46 = scmp.ne.s32.totalorder %s29, %s45
      %p47 = scmp.eq.s32.totalorder %s21, 0
      %p48 = por %p46, %p47
      %s50 = sadd.s32 %s49, 1
      %p53 = scmp.eq.s32.totalorder %s15, 1
      %p54 = scmp.ne.s32.totalorder %s49, %s51
      %p55 = scmp.eq.s32.totalorder %s15, 0
      %p56 = por %p54, %p55
      %p57 = scmp.ne.s32.totalorder %s49, %s51
      %p58 = scmp.eq.s32.totalorder %s20, 1
      %p59 = por %p57, %p58
      %p60 = scmp.ne.s32.totalorder %s51, %s52
      %p61 = scmp.eq.s32.totalorder %s20, 0
      %p62 = por %p60, %p61
      %p63 = scmp.ne.s32.totalorder %s51, %s52
      %p64 = scmp.eq.s32.totalorder %s21, 1
      %p65 = por %p63, %p64
      %p67 = scmp.ne.s32.totalorder %s52, %s66
      %p68 = scmp.eq.s32.totalorder %s21, 0
      %p69 = por %p67, %p68
      %s71 = sadd.s32 %s70, 1
      %p74 = scmp.eq.s32.totalorder %s15, 1
      %p75 = scmp.ne.s32.totalorder %s70, %s72
      %p76 = scmp.eq.s32.totalorder %s15, 0
      %p77 = por %p75, %p76
      %p78 = scmp.ne.s32.totalorder %s70, %s72
      %p79 = scmp.eq.s32.totalorder %s20, 1
      %p80 = por %p78, %p79
      %p81 = scmp.ne.s32.totalorder %s72, %s73
      %p82 = scmp.eq.s32.totalorder %s20, 0
      %p83 = por %p81, %p82
      %p84 = scmp.ne.s32.totalorder %s72, %s73
      %p85 = scmp.eq.s32.totalorder %s21, 1
      %p86 = por %p84, %p85
      %p88 = scmp.ne.s32.totalorder %s73, %s87
      %p89 = scmp.eq.s32.totalorder %s21, 0
      %p90 = por %p88, %p89
      %s92 = sadd.s32 %s91, 1
      %p95 = scmp.eq.s32.totalorder %s15, 1
      %p96 = scmp.ne.s32.totalorder %s91, %s93
      %p97 = scmp.eq.s32.totalorder %s15, 0
      %p98 = por %p96, %p97
      %p99 = scmp.ne.s32.totalorder %s91, %s93
      %p100 = scmp.eq.s32.totalorder %s20, 1
      %p101 = por %p99, %p100
      %p102 = scmp.ne.s32.totalorder %s93, %s94
      %p103 = scmp.eq.s32.totalorder %s20, 0
      %p104 = por %p102, %p103
      %p105 = scmp.ne.s32.totalorder %s93, %s94
      %p106 = scmp.eq.s32.totalorder %s21, 1
      %p107 = por %p105, %p106
      %p109 = scmp.ne.s32.totalorder %s94, %s108
      %p110 = scmp.eq.s32.totalorder %s21, 0
      %p111 = por %p109, %p110
      %s113 = sadd.s32 %s112, 1
      %p116 = scmp.eq.s32.totalorder %s15, 1
      %p117 = scmp.ne.s32.totalorder %s112, %s114
      %p118 = scmp.eq.s32.totalorder %s15, 0
      %p119 = por %p117, %p118
      %p120 = scmp.ne.s32.totalorder %s112, %s114
      %p121 = scmp.eq.s32.totalorder %s20, 1
      %p122 = por %p120, %p121
      %p123 = scmp.ne.s32.totalorder %s114, %s115
      %p124 = scmp.eq.s32.totalorder %s20, 0
      %p125 = por %p123, %p124
      %p126 = scmp.ne.s32.totalorder %s114, %s115
      %p127 = scmp.eq.s32.totalorder %s21, 1
      %p128 = por %p126, %p127
      %p130 = scmp.ne.s32.totalorder %s115, %s129
      %p131 = scmp.eq.s32.totalorder %s21, 0
      %p132 = por %p130, %p131
      %s133 = ssub.s32 %s15, %s22
      %p134 = scmp.eq.s32.totalorder %s133, 0
      %s136 = sadd.s32 %s135, 1
      %s137 = scalar_select %p134, %s135, %s136
      %p140 = pneg %p134
      %p141 = scmp.eq.s32.totalorder %s15, 1
      %p142 = por %p140, %p141
      %p143 = scmp.ne.s32.totalorder %s135, %s138
      %p144 = scmp.eq.s32.totalorder %s15, 0
      %p145 = por %p143, %p144
      %p146 = scmp.ne.s32.totalorder %s135, %s138
      %p147 = scmp.eq.s32.totalorder %s20, 1
      %p148 = por %p146, %p147
      %p149 = scmp.ne.s32.totalorder %s138, %s139
      %p150 = scmp.eq.s32.totalorder %s20, 0
      %p151 = por %p149, %p150
      %p152 = scmp.ne.s32.totalorder %s138, %s139
      %p153 = scmp.eq.s32.totalorder %s21, 1
      %p154 = por %p152, %p153
      %p156 = scmp.ne.s32.totalorder %s139, %s155
      %p157 = scmp.eq.s32.totalorder %s21, 0
      %p158 = por %p156, %p157
      %p159 = scmp.le.s32.totalorder 1, %s15
      %p160 = scmp.lt.s32.totalorder %s15, 3
      %p161 = pnand %p159, %p160
      %p162 = pneg %p161
      // Predicated region
      $region9: #{tpu_custom_call.1} parent=5 // pred_check
        _
      $region10: #{tpu_custom_call.1} parent=5 // pred_check_branch
        %164 = sbr.rel (%p161) target = $region12
      $region11: #{tpu_custom_call.1} parent=5 // pred_region
        %s165 = ssub.s32 %s15, 1
        // Predicated region
        $region13: #{tpu_custom_call.1} parent=11 // pred_check
          %p166 = pneg %p62
        $region14: #{tpu_custom_call.1} parent=11 // pred_check_branch
          %168 = sbr.rel (%p166) target = $region16
        $region15: #{tpu_custom_call.1} parent=11 // pred_region
          _
        $region16: #{tpu_custom_call.1} parent=11 // pred_fallthru
          _
        // Predicated region
        $region17: #{tpu_custom_call.1} parent=11 // pred_check
          %p169 = pneg %p83
        $region18: #{tpu_custom_call.1} parent=11 // pred_check_branch
          %171 = sbr.rel (%p169) target = $region20
        $region19: #{tpu_custom_call.1} parent=11 // pred_region
          _
        $region20: #{tpu_custom_call.1} parent=11 // pred_fallthru
          _
        // Predicated region
        $region21: #{tpu_custom_call.1} parent=11 // pred_check
          %p172 = pneg %p104
        $region22: #{tpu_custom_call.1} parent=11 // pred_check_branch
          %174 = sbr.rel (%p172) target = $region24
        $region23: #{tpu_custom_call.1} parent=11 // pred_region
          _
        $region24: #{tpu_custom_call.1} parent=11 // pred_fallthru
          _
        // Predicated region
        $region25: #{tpu_custom_call.1} parent=11 // pred_check
          %p175 = pneg %p125
        $region26: #{tpu_custom_call.1} parent=11 // pred_check_branch
          %177 = sbr.rel (%p175) target = $region28
        $region27: #{tpu_custom_call.1} parent=11 // pred_region
          _
        $region28: #{tpu_custom_call.1} parent=11 // pred_fallthru
          _
      $region12: #{tpu_custom_call.1} parent=5 // pred_fallthru
        _
      %p178 = scmp.lt.s32.totalorder %s15, 2
      // Predicated region
      $region29: #{tpu_custom_call.1} parent=5 // pred_check
        %p179 = pneg %p178
      $region30: #{tpu_custom_call.1} parent=5 // pred_check_branch
        %181 = sbr.rel (%p179) target = $region32
      $region31: #{tpu_custom_call.1} parent=5 // pred_region
        // Predicated region
        $region33: #{tpu_custom_call.1} parent=31 // pred_check
          %p182 = pneg %p35
        $region34: #{tpu_custom_call.1} parent=31 // pred_check_branch
          %184 = sbr.rel (%p182) target = $region36
        $region35: #{tpu_custom_call.1} parent=31 // pred_region
          %s185 = smul.u32 64, %s15
          %p186 = scmp.lt.s32.totalorder %s185, 127
          %s187 = scalar_select %p186, %s185, 127
          %s188 = smul.addr %s187, 8
          %s189 = scalar_lea.vmem %s0, %s188
          %s190 = smul.u32 64, %s15
        $region36: #{tpu_custom_call.1} parent=31 // pred_fallthru
          _
      $region32: #{tpu_custom_call.1} parent=5 // pred_fallthru
        _
      %p191 = scmp.le.s32.totalorder 1, %s15
      %p192 = scmp.lt.s32.totalorder %s15, 3
      %p193 = pnand %p191, %p192
      %p194 = pneg %p193
      // Predicated region
      $region37: #{tpu_custom_call.1} parent=5 // pred_check
        _
      $region38: #{tpu_custom_call.1} parent=5 // pred_check_branch
        %196 = sbr.rel (%p193) target = $region40
      $region39: #{tpu_custom_call.1} parent=5 // pred_region
        %s197 = ssub.s32 %s15, 1
        %s198 = smul.u32 64, %s20
        %p199 = scmp.lt.s32.totalorder %s198, 127
        %s200 = scalar_select %p199, %s198, 127
        %s201 = smul.addr %s200, 8
        %s202 = scalar_lea.vmem %s0, %s201
        %p203 = pneg %p41
        %p204 = pneg %p38
        %p205 = pneg %p62
        %p206 = pneg %p59
        %p207 = pneg %p83
        %p208 = pneg %p80
        %p209 = pneg %p104
        %p210 = pneg %p101
        %p211 = pneg %p125
        %p212 = pneg %p122
        %p213 = pneg %p151
        %p214 = pneg %p148
        %s215 = sand.u32 %s138, 1
        %s216 = scalar_lea.sflag [#allocation4], %s215
        %s217 = sand.u32 %s138, 1
        %s218 = smul.addr %s217, 4
        %s219 = scalar_lea.vmem [#allocation3], %s218
        %s220 = smul.u32 64, %s20
        %p221 = scmp.lt.s32.totalorder %s220, 127
        %s222 = scalar_select %p221, %s220, 127
        %s223 = smul.addr %s222, 8
        %s224 = scalar_lea.vmem %s0, %s223
        %s225 = smul.u32 64, %s20
        %s226 = smul.u32 4, %s20
        %v228 = vld [vmem:[%s224] sm:$0xff]
        %v229 = vld [vmem:[%s224 + $0x8] sm:$0xff]
        %v230 = vld [vmem:[%s224 + $0x10] sm:$0xff]
        %v231 = vld [vmem:[%s224 + $0x18] sm:$0xff]
        %v232 = vld [vmem:[%s224 + $0x20] sm:$0xff]
        %v233 = vld [vmem:[%s224 + $0x28] sm:$0xff]
        %v234 = vld [vmem:[%s224 + $0x30] sm:$0xff]
        %v235 = vld [vmem:[%s224 + $0x38] sm:$0xff]
        %v236 = vld [vmem:[%s224 + $0x40] sm:$0xff]
        %v237 = vld [vmem:[%s224 + $0x48] sm:$0xff]
        %v238 = vld [vmem:[%s224 + $0x50] sm:$0xff]
        %v239 = vld [vmem:[%s224 + $0x58] sm:$0xff]
        %v240 = vld [vmem:[%s224 + $0x60] sm:$0xff]
        %v241 = vld [vmem:[%s224 + $0x68] sm:$0xff]
        %v242 = vld [vmem:[%s224 + $0x70] sm:$0xff]
        %v243 = vld [vmem:[%s224 + $0x78] sm:$0xff]
        %v244 = vld [vmem:[%s224 + $0x80] sm:$0xff]
        %v245 = vld [vmem:[%s224 + $0x88] sm:$0xff]
        %v246 = vld [vmem:[%s224 + $0x90] sm:$0xff]
        %v247 = vld [vmem:[%s224 + $0x98] sm:$0xff]
        %v248 = vld [vmem:[%s224 + $0xa0] sm:$0xff]
        %v249 = vld [vmem:[%s224 + $0xa8] sm:$0xff]
        %v250 = vld [vmem:[%s224 + $0xb0] sm:$0xff]
        %v251 = vld [vmem:[%s224 + $0xb8] sm:$0xff]
        %v252 = vld [vmem:[%s224 + $0xc0] sm:$0xff]
        %v253 = vld [vmem:[%s224 + $0xc8] sm:$0xff]
        %v254 = vld [vmem:[%s224 + $0xd0] sm:$0xff]
        %v255 = vld [vmem:[%s224 + $0xd8] sm:$0xff]
        %v256 = vld [vmem:[%s224 + $0xe0] sm:$0xff]
        %v257 = vld [vmem:[%s224 + $0xe8] sm:$0xff]
        %v258 = vld [vmem:[%s224 + $0xf0] sm:$0xff]
        %v259 = vld [vmem:[%s224 + $0xf8] sm:$0xff]
        %v260 = vld [vmem:[%s224 + $0x100] sm:$0xff]
        %v261 = vld [vmem:[%s224 + $0x108] sm:$0xff]
        %v262 = vld [vmem:[%s224 + $0x110] sm:$0xff]
        %v263 = vld [vmem:[%s224 + $0x118] sm:$0xff]
        %v264 = vld [vmem:[%s224 + $0x120] sm:$0xff]
        %v265 = vld [vmem:[%s224 + $0x128] sm:$0xff]
        %v266 = vld [vmem:[%s224 + $0x130] sm:$0xff]
        %v267 = vld [vmem:[%s224 + $0x138] sm:$0xff]
        %v268 = vld [vmem:[%s224 + $0x140] sm:$0xff]
        %v269 = vld [vmem:[%s224 + $0x148] sm:$0xff]
        %v270 = vld [vmem:[%s224 + $0x150] sm:$0xff]
        %v271 = vld [vmem:[%s224 + $0x158] sm:$0xff]
        %v272 = vld [vmem:[%s224 + $0x160] sm:$0xff]
        %v273 = vld [vmem:[%s224 + $0x168] sm:$0xff]
        %v274 = vld [vmem:[%s224 + $0x170] sm:$0xff]
        %v275 = vld [vmem:[%s224 + $0x178] sm:$0xff]
        %v276 = vld [vmem:[%s224 + $0x180] sm:$0xff]
        %v277 = vld [vmem:[%s224 + $0x188] sm:$0xff]
        %v278 = vld [vmem:[%s224 + $0x190] sm:$0xff]
        %v279 = vld [vmem:[%s224 + $0x198] sm:$0xff]
        %v280 = vld [vmem:[%s224 + $0x1a0] sm:$0xff]
        %v281 = vld [vmem:[%s224 + $0x1a8] sm:$0xff]
        %v282 = vld [vmem:[%s224 + $0x1b0] sm:$0xff]
        %v283 = vld [vmem:[%s224 + $0x1b8] sm:$0xff]
        %v284 = vld [vmem:[%s224 + $0x1c0] sm:$0xff]
        %v285 = vld [vmem:[%s224 + $0x1c8] sm:$0xff]
        %v286 = vld [vmem:[%s224 + $0x1d0] sm:$0xff]
        %v287 = vld [vmem:[%s224 + $0x1d8] sm:$0xff]
        %v288 = vld [vmem:[%s224 + $0x1e0] sm:$0xff]
        %v289 = vld [vmem:[%s224 + $0x1e8] sm:$0xff]
        %v290 = vld [vmem:[%s224 + $0x1f0] sm:$0xff]
        %v291 = vld [vmem:[%s224 + $0x1f8] sm:$0xff]
        %v292 = vpack.c.bf16 %v229, %v228
        %v293 = vpack.c.bf16 %v231, %v230
        %v294 = vpack.c.bf16 %v233, %v232
        %v295 = vpack.c.bf16 %v235, %v234
        %v296 = vpack.c.bf16 %v237, %v236
        %v297 = vpack.c.bf16 %v239, %v238
        %v298 = vpack.c.bf16 %v241, %v240
        %v299 = vpack.c.bf16 %v243, %v242
        %v300 = vpack.c.bf16 %v245, %v244
        %v301 = vpack.c.bf16 %v247, %v246
        %v302 = vpack.c.bf16 %v249, %v248
        %v303 = vpack.c.bf16 %v251, %v250
        %v304 = vpack.c.bf16 %v253, %v252
        %v305 = vpack.c.bf16 %v255, %v254
        %v306 = vpack.c.bf16 %v257, %v256
        %v307 = vpack.c.bf16 %v259, %v258
        %v308 = vpack.c.bf16 %v261, %v260
        %v309 = vpack.c.bf16 %v263, %v262
        %v310 = vpack.c.bf16 %v265, %v264
        %v311 = vpack.c.bf16 %v267, %v266
        %v312 = vpack.c.bf16 %v269, %v268
        %v313 = vpack.c.bf16 %v271, %v270
        %v314 = vpack.c.bf16 %v273, %v272
        %v315 = vpack.c.bf16 %v275, %v274
        %v316 = vpack.c.bf16 %v277, %v276
        %v317 = vpack.c.bf16 %v279, %v278
        %v318 = vpack.c.bf16 %v281, %v280
        %v319 = vpack.c.bf16 %v283, %v282
        %v320 = vpack.c.bf16 %v285, %v284
        %v321 = vpack.c.bf16 %v287, %v286
        %v322 = vpack.c.bf16 %v289, %v288
        %v323 = vpack.c.bf16 %v291, %v290
        %v324 = vld [vmem:[%s1] sm:$0xf]
        %v325 = vld [vmem:[%s1 + $0x4] sm:$0xf]
        %v326 = vld [vmem:[%s1 + $0x8] sm:$0xf]
        %v327 = vld [vmem:[%s1 + $0xc] sm:$0xf]
        %v328 = vld [vmem:[%s2] sm:$0xff]
        %v329 = vld [vmem:[%s2 + $0x8] sm:$0xff]
        %v330 = vld [vmem:[%s2 + $0x10] sm:$0xff]
        %v331 = vld [vmem:[%s2 + $0x18] sm:$0xff]
        %333 = vset.pattern.permute.xlu0 0
        %334 = vperm.xlu0 %333, %v328
        %v335 = vpop.permute.xlu0 %334
        %338 = vset.pattern.permute.xlu0 0
        %339 = vperm.xlu0 %338, %v329
        %v340 = vpop.permute.xlu0 %339
        %343 = vset.pattern.permute.xlu0 0
        %344 = vperm.xlu0 %343, %v330
        %v345 = vpop.permute.xlu0 %344
        %348 = vset.pattern.permute.xlu0 0
        %349 = vperm.xlu0 %348, %v331
        %v350 = vpop.permute.xlu0 %349
        %v356 = vunpack.c.l.b16 %v324
        %v357 = vunpack.c.l.b16 %v325
        %v358 = vunpack.c.l.b16 %v326
        %v359 = vunpack.c.l.b16 %v327
        %v360 = vpack.c.b16 %v357, %v356
        %v361 = vpack.c.b16 %v359, %v358
        %vm362 = vcmask 261120
        %v364 = vsel %vm362, %v360, 0
        %v367 = vsel %vm362, %v361, 0
        %v370 = vsel %vm362, %v292, 0
        %v373 = vsel %vm362, %v293, 0
        %v376 = vsel %vm362, %v294, 0
        %v379 = vsel %vm362, %v295, 0
        %v382 = vsel %vm362, %v296, 0
        %v385 = vsel %vm362, %v297, 0
        %v388 = vsel %vm362, %v298, 0
        %v391 = vsel %vm362, %v299, 0
        %v394 = vsel %vm362, %v300, 0
        %v397 = vsel %vm362, %v301, 0
        %v400 = vsel %vm362, %v302, 0
        %v403 = vsel %vm362, %v303, 0
        %v406 = vsel %vm362, %v304, 0
        %v409 = vsel %vm362, %v305, 0
        %v412 = vsel %vm362, %v306, 0
        %v415 = vsel %vm362, %v307, 0
        %v418 = vsel %vm362, %v308, 0
        %v421 = vsel %vm362, %v309, 0
        %v424 = vsel %vm362, %v310, 0
        %v427 = vsel %vm362, %v311, 0
        %v430 = vsel %vm362, %v312, 0
        %v433 = vsel %vm362, %v313, 0
        %v436 = vsel %vm362, %v314, 0
        %v439 = vsel %vm362, %v315, 0
        %v442 = vsel %vm362, %v316, 0
        %v445 = vsel %vm362, %v317, 0
        %v448 = vsel %vm362, %v318, 0
        %v451 = vsel %vm362, %v319, 0
        %v454 = vsel %vm362, %v320, 0
        %v457 = vsel %vm362, %v321, 0
        %v460 = vsel %vm362, %v322, 0
        %v463 = vsel %vm362, %v323, 0
        %465 = vmatpush.bf16.xpose.msra.mxu0 %v391
        %466 = vmatpush.bf16.xpose.msra.mxu0 %v388
        %467 = vmatpush.bf16.xpose.msra.mxu0 %v385
        %468 = vmatpush.bf16.xpose.msra.mxu0 %v382
        %469 = vmatpush.bf16.xpose.msra.mxu0 %v379
        %470 = vmatpush.bf16.xpose.msra.mxu0 %v376
        %471 = vmatpush.bf16.xpose.msra.mxu0 %v373
        %472 = vmatpush.bf16.xpose.msra.mxu0 %v370
        %473 = vmatmul.bf16.gmra.mxu0 %v364
        %v474 = vpop.f32.mrf.mxu0
        %v475 = vadd.f32 %v335, %v474
        %v476 = vpop.f32.mrf.mxu0
        %v477 = vadd.f32 %v340, %v476
        %478 = vmatmul.bf16.gmra.mxu0 %v367
        %v479 = vpop.f32.mrf.mxu0
        %v480 = vadd.f32 %v345, %v479
        %v481 = vpop.f32.mrf.mxu0
        %v482 = vadd.f32 %v350, %v481
        %483 = vdwg.mxu0
        %484 = vmatpush.bf16.xpose.msra.mxu0 %v415
        %485 = vmatpush.bf16.xpose.msra.mxu0 %v412
        %486 = vmatpush.bf16.xpose.msra.mxu0 %v409
        %487 = vmatpush.bf16.xpose.msra.mxu0 %v406
        %488 = vmatpush.bf16.xpose.msra.mxu0 %v403
        %489 = vmatpush.bf16.xpose.msra.mxu0 %v400
        %490 = vmatpush.bf16.xpose.msra.mxu0 %v397
        %491 = vmatpush.bf16.xpose.msra.mxu0 %v394
        %492 = vmatmul.bf16.gmra.mxu0 %v364
        %v493 = vpop.f32.mrf.mxu0
        %v494 = vadd.f32 %v335, %v493
        %v495 = vpop.f32.mrf.mxu0
        %v496 = vadd.f32 %v340, %v495
        %497 = vmatmul.bf16.gmra.mxu0 %v367
        %v498 = vpop.f32.mrf.mxu0
        %v499 = vadd.f32 %v345, %v498
        %v500 = vpop.f32.mrf.mxu0
        %v501 = vadd.f32 %v350, %v500
        %502 = vdwg.mxu0
        %503 = vmatpush.bf16.xpose.msra.mxu0 %v439
        %504 = vmatpush.bf16.xpose.msra.mxu0 %v436
        %505 = vmatpush.bf16.xpose.msra.mxu0 %v433
        %506 = vmatpush.bf16.xpose.msra.mxu0 %v430
        %507 = vmatpush.bf16.xpose.msra.mxu0 %v427
        %508 = vmatpush.bf16.xpose.msra.mxu0 %v424
        %509 = vmatpush.bf16.xpose.msra.mxu0 %v421
        %510 = vmatpush.bf16.xpose.msra.mxu0 %v418
        %511 = vmatmul.bf16.gmra.mxu0 %v364
        %v512 = vpop.f32.mrf.mxu0
        %v513 = vadd.f32 %v335, %v512
        %v514 = vpop.f32.mrf.mxu0
        %v515 = vadd.f32 %v340, %v514
        %516 = vmatmul.bf16.gmra.mxu0 %v367
        %v517 = vpop.f32.mrf.mxu0
        %v518 = vadd.f32 %v345, %v517
        %v519 = vpop.f32.mrf.mxu0
        %v520 = vadd.f32 %v350, %v519
        %521 = vdwg.mxu0
        %522 = vmatpush.bf16.xpose.msra.mxu0 %v463
        %523 = vmatpush.bf16.xpose.msra.mxu0 %v460
        %524 = vmatpush.bf16.xpose.msra.mxu0 %v457
        %525 = vmatpush.bf16.xpose.msra.mxu0 %v454
        %526 = vmatpush.bf16.xpose.msra.mxu0 %v451
        %527 = vmatpush.bf16.xpose.msra.mxu0 %v448
        %528 = vmatpush.bf16.xpose.msra.mxu0 %v445
        %529 = vmatpush.bf16.xpose.msra.mxu0 %v442
        %530 = vmatmul.bf16.gmra.mxu0 %v364
        %v531 = vpop.f32.mrf.mxu0
        %v532 = vadd.f32 %v335, %v531
        %v533 = vpop.f32.mrf.mxu0
        %v534 = vadd.f32 %v340, %v533
        %535 = vmatmul.bf16.gmra.mxu0 %v367
        %v536 = vpop.f32.mrf.mxu0
        %v537 = vadd.f32 %v345, %v536
        %v538 = vpop.f32.mrf.mxu0
        %v539 = vadd.f32 %v350, %v538
        %540 = vdwg.mxu0
        %vm541 = vcmp.gt.f32.partialorder %v475, 0.0
        %vm542 = vcmp.gt.f32.partialorder %v494, 0.0
        %vm543 = vcmp.gt.f32.partialorder %v513, 0.0
        %vm544 = vcmp.gt.f32.partialorder %v532, 0.0
        %vm545 = vcmp.gt.f32.partialorder %v477, 0.0
        %vm546 = vcmp.gt.f32.partialorder %v496, 0.0
        %vm547 = vcmp.gt.f32.partialorder %v515, 0.0
        %vm548 = vcmp.gt.f32.partialorder %v534, 0.0
        %vm549 = vcmp.gt.f32.partialorder %v480, 0.0
        %vm550 = vcmp.gt.f32.partialorder %v499, 0.0
        %vm551 = vcmp.gt.f32.partialorder %v518, 0.0
        %vm552 = vcmp.gt.f32.partialorder %v537, 0.0
        %vm553 = vcmp.gt.f32.partialorder %v482, 0.0
        %vm554 = vcmp.gt.f32.partialorder %v501, 0.0
        %vm555 = vcmp.gt.f32.partialorder %v520, 0.0
        %vm556 = vcmp.gt.f32.partialorder %v539, 0.0
        %v557 = vmul.f32 %v475, 0.01
        %v558 = vmul.f32 %v494, 0.01
        %v559 = vmul.f32 %v513, 0.01
        %v560 = vmul.f32 %v532, 0.01
        %v561 = vmul.f32 %v477, 0.01
        %v562 = vmul.f32 %v496, 0.01
        %v563 = vmul.f32 %v515, 0.01
        %v564 = vmul.f32 %v534, 0.01
        %v565 = vmul.f32 %v480, 0.01
        %v566 = vmul.f32 %v499, 0.01
        %v567 = vmul.f32 %v518, 0.01
        %v568 = vmul.f32 %v537, 0.01
        %v569 = vmul.f32 %v482, 0.01
        %v570 = vmul.f32 %v501, 0.01
        %v571 = vmul.f32 %v520, 0.01
        %v572 = vmul.f32 %v539, 0.01
        %v573 = vsel %vm541, %v475, %v557
        %v574 = vsel %vm542, %v494, %v558
        %v575 = vsel %vm543, %v513, %v559
        %v576 = vsel %vm544, %v532, %v560
        %v577 = vsel %vm545, %v477, %v561
        %v578 = vsel %vm546, %v496, %v562
        %v579 = vsel %vm547, %v515, %v563
        %v580 = vsel %vm548, %v534, %v564
        %v581 = vsel %vm549, %v480, %v565
        %v582 = vsel %vm550, %v499, %v566
        %v583 = vsel %vm551, %v518, %v567
        %v584 = vsel %vm552, %v537, %v568
        %v585 = vsel %vm553, %v482, %v569
        %v586 = vsel %vm554, %v501, %v570
        %v587 = vsel %vm555, %v520, %v571
        %v588 = vsel %vm556, %v539, %v572
        %v589 = vld [vmem:[%s3] sm:$0x1]
        %v590 = vpack.c.bf16 %v577, %v573
        %v591 = vpack.c.bf16 %v578, %v574
        %v592 = vpack.c.bf16 %v579, %v575
        %v593 = vpack.c.bf16 %v580, %v576
        %v594 = vpack.c.bf16 %v585, %v581
        %v595 = vpack.c.bf16 %v586, %v582
        %v596 = vpack.c.bf16 %v587, %v583
        %v597 = vpack.c.bf16 %v588, %v584
        %s598 = sld [smem:[#allocation2]]
        %v599 = vstv %s598
        %v601 = vsel %vm362, %v589, 0
        %603 = vmatpush.bf16.msra.mxu0 0
        %604 = vmatpush.bf16.msra.mxu0 0
        %605 = vmatpush.bf16.msra.mxu0 0
        %606 = vmatpush.bf16.msra.mxu0 0
        %607 = vmatpush.bf16.msra.mxu0 0
        %608 = vmatpush.bf16.msra.mxu0 0
        %609 = vmatpush.bf16.msra.mxu0 %v594
        %610 = vmatpush.bf16.msra.mxu0 %v590
        %611 = vmatmul.bf16.gmra.mxu0 %v601
        %v612 = vpop.f32.mrf.mxu0
        %v613 = vadd.f32 %v599, %v612
        %v614 = vpop.f32.mrf.mxu0
        %615 = vdwg.mxu0
        %616 = vmatpush.bf16.msra.mxu0 0
        %617 = vmatpush.bf16.msra.mxu0 0
        %618 = vmatpush.bf16.msra.mxu0 0
        %619 = vmatpush.bf16.msra.mxu0 0
        %620 = vmatpush.bf16.msra.mxu0 0
        %621 = vmatpush.bf16.msra.mxu0 0
        %622 = vmatpush.bf16.msra.mxu0 %v595
        %623 = vmatpush.bf16.msra.mxu0 %v591
        %624 = vmatmul.bf16.gmra.mxu0 %v601
        %v625 = vpop.f32.mrf.mxu0
        %v626 = vadd.f32 %v599, %v625
        %v627 = vpop.f32.mrf.mxu0
        %628 = vdwg.mxu0
        %629 = vmatpush.bf16.msra.mxu0 0
        %630 = vmatpush.bf16.msra.mxu0 0
        %631 = vmatpush.bf16.msra.mxu0 0
        %632 = vmatpush.bf16.msra.mxu0 0
        %633 = vmatpush.bf16.msra.mxu0 0
        %634 = vmatpush.bf16.msra.mxu0 0
        %635 = vmatpush.bf16.msra.mxu0 %v596
        %636 = vmatpush.bf16.msra.mxu0 %v592
        %637 = vmatmul.bf16.gmra.mxu0 %v601
        %v638 = vpop.f32.mrf.mxu0
        %v639 = vadd.f32 %v599, %v638
        %v640 = vpop.f32.mrf.mxu0
        %641 = vdwg.mxu0
        %642 = vmatpush.bf16.msra.mxu0 0
        %643 = vmatpush.bf16.msra.mxu0 0
        %644 = vmatpush.bf16.msra.mxu0 0
        %645 = vmatpush.bf16.msra.mxu0 0
        %646 = vmatpush.bf16.msra.mxu0 0
        %647 = vmatpush.bf16.msra.mxu0 0
        %648 = vmatpush.bf16.msra.mxu0 %v597
        %649 = vmatpush.bf16.msra.mxu0 %v593
        %650 = vmatmul.bf16.gmra.mxu0 %v601
        %v651 = vpop.f32.mrf.mxu0
        %v652 = vadd.f32 %v599, %v651
        %v653 = vpop.f32.mrf.mxu0
        %654 = vdwg.mxu0
        %v655 = vsub.f32 0.0, %v613
        %v656 = vsub.f32 0.0, %v626
        %v657 = vsub.f32 0.0, %v639
        %v658 = vsub.f32 0.0, %v652
        %v659 = vmul.f32 %v655, 1.442695
        %v660 = vpow.pop %v659
        %v661 = vmul.f32 %v656, 1.442695
        %v662 = vpow.pop %v661
        %v663 = vmul.f32 %v657, 1.442695
        %v664 = vpow.pop %v663
        %v665 = vmul.f32 %v658, 1.442695
        %v666 = vpow.pop %v665
        %v667 = vadd.f32 %v660, 1.0
        %v668 = vadd.f32 %v662, 1.0
        %v669 = vadd.f32 %v664, 1.0
        %v670 = vadd.f32 %v666, 1.0
        %v671 = vrcp.pop %v667
        %v672 = vrcp.pop %v668
        %v673 = vrcp.pop %v669
        %v674 = vrcp.pop %v670
        %v679 = vrot.slane %v672, 7
        %v680 = vrot.slane %v673, 6
        %v681 = vrot.slane %v674, 5
        %vm682 = vcmask 1040384
        %v683 = vsel %vm682, %v671, %v679
        %vm684 = vcmask 1042434
        %v685 = vsel %vm684, %v680, %v681
        %vm686 = vcmask 1041408
        %v687 = vsel %vm686, %v683, %v685
        %v689 = vlaneseq
        %vm690 = vcmp.ge.s32.totalorder %v689, 0
        %vm691 = vcmp.lt.s32.totalorder %v689, 512
        %vm692 = vmand %vm690, %vm691
        %693 = vst.msk [vmem:[%s219] sm:$0xf] %vm692, %v687
        %s694 = sand.u32 %s138, 1
        %s695 = scalar_lea.sflag [#allocation4], %s694
        %s696 = sand.u32 %s138, 1
        %s697 = smul.addr %s696, 4
        %s698 = scalar_lea.vmem [#allocation3], %s697
        // Predicated region
        $region41: #{tpu_custom_call.1} parent=39 // pred_check
          %p699 = pneg %p148
        $region42: #{tpu_custom_call.1} parent=39 // pred_check_branch
          %701 = sbr.rel (%p699) target = $region44
        $region43: #{tpu_custom_call.1} parent=39 // pred_region
          %s702 = smul.u32 4, %s20
          %704 = vsyncadd %s695, 0
          %s705 = scalar_lea.hbm %s5, %s702
          %s707 = sshll.u32 %s698, 4
          %s708 = int_to_ptr.vmem [resolvable:$true] %s707
          %s709 = sshll.u32 %s705, 4
          %s710 = int_to_ptr.hbm [resolvable:$true] %s709
          %712 = dma.vmem_to_hbm [thread:$0]  %s708, 64, %s710, %s695
        $region44: #{tpu_custom_call.1} parent=39 // pred_fallthru
          _
      $region40: #{tpu_custom_call.1} parent=5 // pred_fallthru
        _
      %p713 = scmp.le.s32.totalorder 2, %s15
      // Predicated region
      $region45: #{tpu_custom_call.1} parent=5 // pred_check
        %p714 = pneg %p713
      $region46: #{tpu_custom_call.1} parent=5 // pred_check_branch
        %716 = sbr.rel (%p714) target = $region48
      $region47: #{tpu_custom_call.1} parent=5 // pred_region
        %s717 = ssub.s32 %s15, 2
        // Predicated region
        $region49: #{tpu_custom_call.1} parent=47 // pred_check
          %p718 = pneg %p154
        $region50: #{tpu_custom_call.1} parent=47 // pred_check_branch
          %720 = sbr.rel (%p718) target = $region52
        $region51: #{tpu_custom_call.1} parent=47 // pred_region
          %s721 = sand.u32 %s139, 1
          %s722 = scalar_lea.sflag [#allocation4], %s721
          %s723 = sand.u32 %s139, 1
          %s724 = smul.addr %s723, 4
          %s725 = scalar_lea.vmem [#allocation3], %s724
          %727 = dma.done %s722, 64
        $region52: #{tpu_custom_call.1} parent=47 // pred_fallthru
          _
      $region48: #{tpu_custom_call.1} parent=5 // pred_fallthru
        _
    $region6: #{tpu_custom_call.1} parent=1 // loop_footer
      %s19 = sadd.s32 1, %s15
    $region7: #{tpu_custom_call.1} parent=1 // loop_footer_branch
      %14 = sbr.rel target = $region3
    $region8: #{tpu_custom_call.1} parent=1 // loop_exit
      _
    %728 = vsyncpa [#allocation4], 1
    %s729 = scalar_lea.sflag [#allocation4], 1
    %730 = vsyncpa %s729, 1

</llo_original>
